<compile_context>
chip_gen: v6e
topology: v6e:2x2x1
jax: 0.10.0
libtpu: 0.0.40
codegen_flags: <defaults>
</compile_context>

<pallas_src>
import functools
import math

import jax
import jax.numpy as jnp
from jax.experimental import pallas as pl
from jax.experimental.pallas import tpu as pltpu

D_MODEL = 256
DROPOUT_P = 0.1
MAX_LEN = 1001


# ----------------------------------------------------------------------------
# pe table (equivalent of the PyTorch register_buffer, built once at init)
# ----------------------------------------------------------------------------
def make_positional_encoding(max_len, d_model, dtype=jnp.float32):
    position = jnp.arange(max_len, dtype=jnp.float32)[:, None]            # (L, 1)
    div_term = jnp.exp(jnp.arange(0, d_model, 2, dtype=jnp.float32)
                       * (-math.log(10000.0) / d_model))                  # (D/2,)
    angles = position * div_term                                          # (L, D/2)
    pe = jnp.zeros((max_len, d_model), dtype=jnp.float32)
    pe = pe.at[:, 0::2].set(jnp.sin(angles))
    pe = pe.at[:, 1::2].set(jnp.cos(angles))
    return pe.astype(dtype)


# ----------------------------------------------------------------------------
# Kernels
# ----------------------------------------------------------------------------
def _pe_add_kernel(x_ref, pe_ref, o_ref):
    # x_ref/o_ref: (tile_s, D) view of one batch row's seq tile; pe_ref: (tile_s, D)
    y = x_ref[...].astype(jnp.float32) + pe_ref[...].astype(jnp.float32)
    o_ref[...] = y.astype(o_ref.dtype)


def _mix32(x):
    # splitmix32-style finalizer; uniform bits from sequential counters.
    x = x ^ (x >> 16)
    x = x * jnp.uint32(0x7FEB352D)
    x = x ^ (x >> 15)
    x = x * jnp.uint32(0x846CA68B)
    x = x ^ (x >> 16)
    return x


def _pe_add_dropout_kernel(seed_ref, x_ref, pe_ref, o_ref, *, p, n_s_blocks):
    y = x_ref[...].astype(jnp.float32) + pe_ref[...].astype(jnp.float32)
    tile_s, d = y.shape

    # Unique 32-bit counter per element across the whole (B, S, D) tensor.
    s_idx = pl.program_id(0).astype(jnp.uint32)
    b_idx = pl.program_id(1).astype(jnp.uint32)
    block_id = b_idx * jnp.uint32(n_s_blocks) + s_idx
    row = jax.lax.broadcasted_iota(jnp.uint32, y.shape, 0)
    col = jax.lax.broadcasted_iota(jnp.uint32, y.shape, 1)
    ctr = (block_id * jnp.uint32(tile_s) + row) * jnp.uint32(d) + col

    seed = seed_ref[0].astype(jnp.uint32)
    bits = _mix32(ctr ^ (seed * jnp.uint32(0x9E3779B9)))
    bits = _mix32(bits + jnp.uint32(0x9E3779B9))

    # keep with probability (1 - p): single integer compare, no float uniform.
    thr = jnp.uint32(min(int(round(p * 4294967296.0)), 0xFFFFFFFF))
    keep = bits >= thr
    scale = 1.0 / (1.0 - p)
    o_ref[...] = jnp.where(keep, y * scale, 0.0).astype(o_ref.dtype)


# ----------------------------------------------------------------------------
# Wrapper
# ----------------------------------------------------------------------------
def positional_encoding_forward(x, pe, *, dropout_p=DROPOUT_P, train=False,
                                seed=0, tile_s=None):
    """x: (B, S, D), pe: (max_len, D) with S <= max_len, D multiple of 128."""
    B, S, D = x.shape
    assert pe.shape[1] == D and S <= pe.shape[0]
    if pe.dtype != x.dtype:
        pe = pe.astype(x.dtype)   # tiny one-time cast; keeps pe bytes == x bytes/row

    if tile_s is None:
        # 512-row f32 blocks (~512 KiB) reach ~85%+ of HBM roofline for a
        # streaming elementwise op; double-buffered {x, pe, out} ~3 MiB, well
        # under every generation's scoped VMEM (v7x included).
        tile_s = min(512, ((S + 7) // 8) * 8)
    n_s = pl.cdiv(S, tile_s)
    # Batch innermost: pe block index (s, 0) is unchanged across consecutive
    # steps, so the pipeline fetches each pe tile once instead of B times.
    grid = (n_s, B)

    x_spec = pl.BlockSpec((None, tile_s, D), lambda s, b: (b, s, 0))
    pe_spec = pl.BlockSpec((tile_s, D), lambda s, b: (s, 0))
    out_spec = pl.BlockSpec((None, tile_s, D), lambda s, b: (b, s, 0))
    out_shape = jax.ShapeDtypeStruct(x.shape, x.dtype)
    cparams = pltpu.CompilerParams(
        dimension_semantics=("parallel", "parallel"))

    if (not train) or dropout_p == 0.0:
        return pl.pallas_call(
            _pe_add_kernel,
            grid=grid,
            in_specs=[x_spec, pe_spec],
            out_specs=out_spec,
            out_shape=out_shape,
            compiler_params=cparams,
        )(x, pe)

    seed_arr = jnp.asarray([seed], dtype=jnp.int32)
    kern = functools.partial(_pe_add_dropout_kernel,
                             p=float(dropout_p), n_s_blocks=int(n_s))
    return pl.pallas_call(
        kern,
        grid=grid,
        in_specs=[pl.BlockSpec(memory_space=pltpu.MemorySpace.SMEM),
                  x_spec, pe_spec],
        out_specs=out_spec,
        out_shape=out_shape,
        compiler_params=cparams,
    )(seed_arr, x, pe)


class PositionalEncoding:
    """JAX/Pallas mirror of the PyTorch PositionalEncoding module."""

    def __init__(self, d_model=D_MODEL, dropout=DROPOUT_P, max_len=MAX_LEN):
        self.p = float(dropout)
        self.pe = make_positional_encoding(max_len, d_model)   # buffer

    def __call__(self, x, *, train=False, seed=0):
        # TODO(synk): dropout RNG stream differs bit-for-bit from torch's (and
        # depends on the tile config); Bernoulli(p)/scale semantics are identical.
        return positional_encoding_forward(x, self.pe, dropout_p=self.p,
                                           train=train, seed=seed)


if __name__ == "__main__":
    B, S, D = 2, 8, D_MODEL          # batch=2, seq=8, d_model=256 (per spec)
    key = jax.random.PRNGKey(0)
    x = jax.random.normal(key, (B, S, D), dtype=jnp.float32)

    module = PositionalEncoding(d_model=D, dropout=DROPOUT_P, max_len=MAX_LEN)

    # eval mode: dropout is identity -> deterministic, check against reference
    out_eval = module(x, train=False)
    ref = x + module.pe[None, :S, :]
    out_eval, ref = jax.block_until_ready((out_eval, ref))
    assert out_eval.shape == (B, S, D)
    assert jnp.allclose(out_eval, ref, atol=1e-5, rtol=1e-5), "eval-mode mismatch"

    # train mode: in-kernel counter-hash dropout (portable: TPU + interpret)
    out_train = module(x, train=True, seed=42)
    out_train = jax.block_until_ready(out_train)
    assert out_train.shape == (B, S, D)
    assert bool(jnp.all(jnp.isfinite(out_train)))
    scale = 1.0 / (1.0 - DROPOUT_P)
    kept = out_train != 0.0
    # kept elements must equal (x + pe) / (1 - p); dropped elements are 0
    assert bool(jnp.allclose(jnp.where(kept, out_train, 0.0),
                             jnp.where(kept, ref * scale, 0.0),
                             atol=1e-5, rtol=1e-5)), "train-mode value mismatch"
    drop_frac = 1.0 - float(jnp.mean(kept.astype(jnp.float32)))
    assert 0.01 <= drop_frac <= 0.30, f"unexpected drop fraction {drop_frac}"

    print("KERNEL_OK")
</pallas_src>

<mosaic_0001>
module attributes {stable_mosaic.version = 11 : i64} {
  func.func @_pe_add_kernel(%arg0: i32, %arg1: i32, %arg2: memref<1x8x256xf32, #tpu.memory_space<vmem>>, %arg3: memref<8x256xf32, #tpu.memory_space<vmem>>, %arg4: memref<1x8x256xf32, #tpu.memory_space<vmem>>) attributes {dimension_semantics = [#tpu.dimension_semantics<parallel>, #tpu.dimension_semantics<parallel>], iteration_bounds = array<i64: 1, 2>, scalar_prefetch = 0 : i64, scratch_operands = 0 : i64, tpu.core_type = #tpu.core_type<tc>, window_params = [{transform_indices = @transform_0, window_bounds = array<i64: 1, 8, 256>}, {transform_indices = @transform_1, window_bounds = array<i64: 8, 256>}, {transform_indices = @transform_2, window_bounds = array<i64: 1, 8, 256>}]} {
    %c0 = arith.constant 0 : index
    %c0_0 = arith.constant 0 : index
    %c0_1 = arith.constant 0 : index
    %0 = vector.load %arg2[%c0, %c0_0, %c0_1] : memref<1x8x256xf32, #tpu.memory_space<vmem>>, vector<1x8x256xf32>
    %1 = vector.shape_cast %0 : vector<1x8x256xf32> to vector<8x256xf32>
    %c0_2 = arith.constant 0 : index
    %c0_3 = arith.constant 0 : index
    %2 = vector.load %arg3[%c0_2, %c0_3] : memref<8x256xf32, #tpu.memory_space<vmem>>, vector<8x256xf32>
    %3 = arith.addf %1, %2 : vector<8x256xf32>
    %c0_4 = arith.constant 0 : index
    %c0_5 = arith.constant 0 : index
    %c0_6 = arith.constant 0 : index
    %4 = vector.load %arg4[%c0_4, %c0_5, %c0_6] : memref<1x8x256xf32, #tpu.memory_space<vmem>>, vector<1x8x256xf32>
    %5 = vector.shape_cast %4 : vector<1x8x256xf32> to vector<8x256xf32>
    %6 = vector.shape_cast %3 : vector<8x256xf32> to vector<1x8x256xf32>
    tpu.vector_store %arg4[%c0_4, %c0_5, %c0_6], %6 {strides = array<i32>} : memref<1x8x256xf32, #tpu.memory_space<vmem>>, vector<1x8x256xf32>,
    return
  }
  func.func @transform_0(%arg0: i32, %arg1: i32) -> (i32, i32, i32) {
    %c0_i32 = arith.constant 0 : i32
    %c0_i32_0 = arith.constant 0 : i32
    return %arg1, %arg0, %c0_i32 : i32, i32, i32
  }
  func.func @transform_1(%arg0: i32, %arg1: i32) -> (i32, i32) {
    %c0_i32 = arith.constant 0 : i32
    %c0_i32_0 = arith.constant 0 : i32
    return %arg0, %c0_i32 : i32, i32
  }
  func.func @transform_2(%arg0: i32, %arg1: i32) -> (i32, i32, i32) {
    %c0_i32 = arith.constant 0 : i32
    %c0_i32_0 = arith.constant 0 : i32
    return %arg1, %arg0, %c0_i32 : i32, i32, i32
  }
}

</mosaic_0001>

<llo_original>
// kernel: tpu_custom_call.1
$region0: #{tpu_custom_call.1}
  #allocation0 [shape = 'u32[]', space=smem, size = 0x4, offset = 0x4, fixed_abs, tag = 'smem constant byte address 0x4 - core index']
  #allocation1 [shape = 'u32[144,128]{1,0:T(1,128)}', space=vmem, size = 0x12000, scoped, tag = 'internal scratch']
  %s0 = inlined_call_operand.hbm [shape: f32[2,8,256], index: 0, kind: input, shape index: {}]
  %s1 = inlined_call_operand.hbm [shape: f32[1001,256], index: 1, kind: input, shape index: {}]
  %s2 = inlined_call_operand.hbm [shape: f32[2,8,256], index: 2, kind: output, shape index: {}]
  %s3 = sld [smem:[#allocation0]]
  $region49: #{tpu_custom_call.1} parent=0
    _
  %s5 = ssub.s32 1, %s3
  %s6 = scalar_select 0, %s5, %s3
  $region1: #{tpu_custom_call.1} parent=0
    #allocation2 [shape = 'u8[16384]{0}', space=vmem, size = 0x4000, scoped, tag = 'input window, operand 0']
    #allocation3 [shape = 's32[2]{0}', space=sflag, size = 0x8, scoped, tag = 'scoped memory for tpu_custom_call.1']
    #allocation4 [shape = 's32[2]{0}', space=sflag, size = 0x8, scoped, tag = 'scoped memory for tpu_custom_call.1']
    #allocation5 [shape = 'u8[8192]{0}', space=vmem, size = 0x2000, scoped, tag = 'input window, operand 1, single buffered']
    #allocation6 [shape = 's32[1]{0}', space=sflag, size = 0x4, scoped, tag = 'scoped memory for tpu_custom_call.1']
    #allocation7 [shape = 'u8[16384]{0}', space=vmem, size = 0x4000, scoped, tag = 'output window, operand 0']
    %7 = vsyncpa [#allocation3], 0
    %s8 = scalar_lea.sflag [#allocation3], 1
    %9 = vsyncpa %s8, 0
    %10 = vsyncpa [#allocation6], 0
    %11 = vsyncpa [#allocation4], 0
    %s12 = scalar_lea.sflag [#allocation4], 1
    %13 = vsyncpa %s12, 0
    loop: start=0, step=1, limit=4
    $region2: #{tpu_custom_call.1} parent=1 // loop_pre_header
      _
    $region3: #{tpu_custom_call.1} parent=1 // loop_header
      %s15 = sphi 0, %s19
      %p16 = scmp.ge.s32.totalorder %s15, 4
      %s22 = sphi 0, %s34
      %s23 = sphi 0, %s30
      %s24 = sphi 0, %s22
      %s25 = sphi 0, %s23
      %s26 = sphi 0, %s24
      %s27 = sphi 0, %s25
      %s39 = sphi 0, %s41
      %s42 = sphi 0, %s39
      %s43 = sphi 0, %s42
      %s59 = sphi 0, %s43
      %s65 = sphi 0, %s67
      %s68 = sphi 0, %s65
      %s69 = sphi 0, %s68
      %s85 = sphi 0, %s69
      %s93 = sphi 0, %s95
      %s96 = sphi 0, %s93
      %s97 = sphi 0, %s96
      %s113 = sphi 0, %s97
    $region4: #{tpu_custom_call.1} parent=1 // loop_header_branch
      %18 = sbr.rel (%p16) target = $region8
    $region5: #{tpu_custom_call.1} parent=1 // loop_body
      %s20 = ssub.s32 %s15, 1
      %s21 = ssub.s32 %s15, 2
      %s28 = sadd.s32 1, %s23
      %p29 = scmp.ge.s32.totalorder %s28, 2
      %s30 = scalar_select %p29, 0, %s28
      %s31 = sadd.s32 1, %s22
      %s32 = scalar_select %p29, %s31, %s22
      %p33 = scmp.ge.s32.totalorder %s32, 1
      %s34 = scalar_select %p33, 0, %s32
      %s35 = ssub.s32 %s23, %s30
      %s36 = ssub.s32 %s22, %s34
      %s37 = sor.u32 %s35, %s36
      %p38 = scmp.eq.s32.totalorder %s37, 0
      %s40 = sadd.s32 %s39, 1
      %s41 = scalar_select %p38, %s39, %s40
      %p44 = pneg %p38
      %p45 = scmp.eq.s32.totalorder %s15, 1
      %p46 = por %p44, %p45
      %p47 = scmp.ne.s32.totalorder %s39, %s42
      %p48 = scmp.eq.s32.totalorder %s15, 0
      %p49 = por %p47, %p48
      %p50 = scmp.ne.s32.totalorder %s39, %s42
      %p51 = scmp.eq.s32.totalorder %s20, 1
      %p52 = por %p50, %p51
      %p53 = scmp.ne.s32.totalorder %s42, %s43
      %p54 = scmp.eq.s32.totalorder %s20, 0
      %p55 = por %p53, %p54
      %p56 = scmp.ne.s32.totalorder %s42, %s43
      %p57 = scmp.eq.s32.totalorder %s21, 1
      %p58 = por %p56, %p57
      %p60 = scmp.ne.s32.totalorder %s43, %s59
      %p61 = scmp.eq.s32.totalorder %s21, 0
      %p62 = por %p60, %p61
      %s63 = ssub.s32 %s22, %s34
      %p64 = scmp.eq.s32.totalorder %s63, 0
      %s66 = sadd.s32 %s65, 1
      %s67 = scalar_select %p64, %s65, %s66
      %p70 = pneg %p64
      %p71 = scmp.eq.s32.totalorder %s15, 1
      %p72 = por %p70, %p71
      %p73 = scmp.ne.s32.totalorder %s65, %s68
      %p74 = scmp.eq.s32.totalorder %s15, 0
      %p75 = por %p73, %p74
      %p76 = scmp.ne.s32.totalorder %s65, %s68
      %p77 = scmp.eq.s32.totalorder %s20, 1
      %p78 = por %p76, %p77
      %p79 = scmp.ne.s32.totalorder %s68, %s69
      %p80 = scmp.eq.s32.totalorder %s20, 0
      %p81 = por %p79, %p80
      %p82 = scmp.ne.s32.totalorder %s68, %s69
      %p83 = scmp.eq.s32.totalorder %s21, 1
      %p84 = por %p82, %p83
      %p86 = scmp.ne.s32.totalorder %s69, %s85
      %p87 = scmp.eq.s32.totalorder %s21, 0
      %p88 = por %p86, %p87
      %s89 = ssub.s32 %s23, %s30
      %s90 = ssub.s32 %s22, %s34
      %s91 = sor.u32 %s89, %s90
      %p92 = scmp.eq.s32.totalorder %s91, 0
      %s94 = sadd.s32 %s93, 1
      %s95 = scalar_select %p92, %s93, %s94
      %p98 = pneg %p92
      %p99 = scmp.eq.s32.totalorder %s15, 1
      %p100 = por %p98, %p99
      %p101 = scmp.ne.s32.totalorder %s93, %s96
      %p102 = scmp.eq.s32.totalorder %s15, 0
      %p103 = por %p101, %p102
      %p104 = scmp.ne.s32.totalorder %s93, %s96
      %p105 = scmp.eq.s32.totalorder %s20, 1
      %p106 = por %p104, %p105
      %p107 = scmp.ne.s32.totalorder %s96, %s97
      %p108 = scmp.eq.s32.totalorder %s20, 0
      %p109 = por %p107, %p108
      %p110 = scmp.ne.s32.totalorder %s96, %s97
      %p111 = scmp.eq.s32.totalorder %s21, 1
      %p112 = por %p110, %p111
      %p114 = scmp.ne.s32.totalorder %s97, %s113
      %p115 = scmp.eq.s32.totalorder %s21, 0
      %p116 = por %p114, %p115
      %p117 = scmp.le.s32.totalorder 1, %s15
      %p118 = scmp.lt.s32.totalorder %s15, 3
      %p119 = pnand %p117, %p118
      %p120 = pneg %p119
      // Predicated region
      $region9: #{tpu_custom_call.1} parent=5 // pred_check
        _
      $region10: #{tpu_custom_call.1} parent=5 // pred_check_branch
        %122 = sbr.rel (%p119) target = $region12
      $region11: #{tpu_custom_call.1} parent=5 // pred_region
        %s123 = ssub.s32 %s15, 1
        // Predicated region
        $region13: #{tpu_custom_call.1} parent=11 // pred_check
          %p124 = pneg %p81
        $region14: #{tpu_custom_call.1} parent=11 // pred_check_branch
          %126 = sbr.rel (%p124) target = $region16
        $region15: #{tpu_custom_call.1} parent=11 // pred_region
          %s128 = ssub.s32 256, 256
          %129 = vsyncadd [#allocation6], %s128
          %s130 = smul.addr %s24, 2
          %s131 = smul.addr %s130, 128
          %s132 = scalar_lea.hbm %s1, %s131
          %s134 = sshll.u32 [#allocation5], 4
          %s135 = int_to_ptr.vmem [resolvable:$true] %s134
          %137 = dma.hbm_to_vmem [thread:$0]  %s132, 256, %s135, [#allocation6]
        $region16: #{tpu_custom_call.1} parent=11 // pred_fallthru
          _
      $region12: #{tpu_custom_call.1} parent=5 // pred_fallthru
        _
      %p138 = scmp.lt.s32.totalorder %s15, 2
      // Predicated region
      $region17: #{tpu_custom_call.1} parent=5 // pred_check
        %p139 = pneg %p138
      $region18: #{tpu_custom_call.1} parent=5 // pred_check_branch
        %141 = sbr.rel (%p139) target = $region20
      $region19: #{tpu_custom_call.1} parent=5 // pred_region
        // Predicated region
        $region21: #{tpu_custom_call.1} parent=19 // pred_check
          %p142 = pneg %p49
        $region22: #{tpu_custom_call.1} parent=19 // pred_check_branch
          %144 = sbr.rel (%p142) target = $region24
        $region23: #{tpu_custom_call.1} parent=19 // pred_region
          %s145 = sand.u32 %s39, 1
          %s146 = scalar_lea.sflag [#allocation3], %s145
          %s147 = sand.u32 %s39, 1
          %s148 = smul.addr %s147, 16
          %s149 = scalar_lea.vmem [#allocation2], %s148
          %s151 = ssub.s32 256, 256
          %152 = vsyncadd %s146, %s151
          %s153 = smul.addr %s22, 2
          %s154 = smul.addr %s23, 2
          %s155 = sadd.s32 %s153, %s154
          %s156 = smul.addr %s155, 128
          %s157 = scalar_lea.hbm %s0, %s156
          %s159 = sshll.u32 %s149, 4
          %s160 = int_to_ptr.vmem [resolvable:$true] %s159
          %162 = dma.hbm_to_vmem [thread:$0]  %s157, 256, %s160, %s146
        $region24: #{tpu_custom_call.1} parent=19 // pred_fallthru
          _
      $region20: #{tpu_custom_call.1} parent=5 // pred_fallthru
        _
      %p163 = scmp.le.s32.totalorder 1, %s15
      %p164 = scmp.lt.s32.totalorder %s15, 3
      %p165 = pnand %p163, %p164
      %p166 = pneg %p165
      // Predicated region
      $region25: #{tpu_custom_call.1} parent=5 // pred_check
        _
      $region26: #{tpu_custom_call.1} parent=5 // pred_check_branch
        %168 = sbr.rel (%p165) target = $region28
      $region27: #{tpu_custom_call.1} parent=5 // pred_region
        %s169 = ssub.s32 %s15, 1
        %s170 = sand.u32 %s42, 1
        %s171 = scalar_lea.sflag [#allocation3], %s170
        %s172 = sand.u32 %s42, 1
        %s173 = smul.addr %s172, 16
        %s174 = scalar_lea.vmem [#allocation2], %s173
        // Predicated region
        $region29: #{tpu_custom_call.1} parent=27 // pred_check
          %p175 = pneg %p55
        $region30: #{tpu_custom_call.1} parent=27 // pred_check_branch
          %177 = sbr.rel (%p175) target = $region32
        $region31: #{tpu_custom_call.1} parent=27 // pred_region
          %178 = dma.done %s171, 256
        $region32: #{tpu_custom_call.1} parent=27 // pred_fallthru
          _
        // Predicated region
        $region33: #{tpu_custom_call.1} parent=27 // pred_check
          %p179 = pneg %p81
        $region34: #{tpu_custom_call.1} parent=27 // pred_check_branch
          %181 = sbr.rel (%p179) target = $region36
        $region35: #{tpu_custom_call.1} parent=27 // pred_region
          %182 = dma.done [#allocation6], 256
        $region36: #{tpu_custom_call.1} parent=27 // pred_fallthru
          _
        %s183 = sand.u32 %s42, 1
        %s184 = scalar_lea.sflag [#allocation3], %s183
        %s185 = sand.u32 %s42, 1
        %s186 = smul.addr %s185, 16
        %s187 = scalar_lea.vmem [#allocation2], %s186
        %p188 = pneg %p55
        %p189 = pneg %p52
        %p190 = pneg %p81
        %p191 = pneg %p78
        %p192 = pneg %p109
        %p193 = pneg %p106
        %s194 = sand.u32 %s96, 1
        %s195 = scalar_lea.sflag [#allocation4], %s194
        %s196 = sand.u32 %s96, 1
        %s197 = smul.addr %s196, 16
        %s198 = scalar_lea.vmem [#allocation7], %s197
        %v199 = vld [vmem:[%s174] sm:$0xff]
        %v200 = vld [vmem:[%s174 + $0x8] sm:$0xff]
        %v201 = vld [vmem:[#allocation5] sm:$0xff]
        %v202 = vld [vmem:[#allocation5 + $0x8] sm:$0xff]
        %v203 = vadd.f32 %v199, %v201
        %v204 = vadd.f32 %v200, %v202
        %205 = vst [vmem:[%s198] sm:$0xff] %v203
        %206 = vst [vmem:[%s198 + $0x8] sm:$0xff] %v204
        %s207 = sand.u32 %s96, 1
        %s208 = scalar_lea.sflag [#allocation4], %s207
        %s209 = sand.u32 %s96, 1
        %s210 = smul.addr %s209, 16
        %s211 = scalar_lea.vmem [#allocation7], %s210
        // Predicated region
        $region37: #{tpu_custom_call.1} parent=27 // pred_check
          %p212 = pneg %p106
        $region38: #{tpu_custom_call.1} parent=27 // pred_check_branch
          %214 = sbr.rel (%p212) target = $region40
        $region39: #{tpu_custom_call.1} parent=27 // pred_region
          %s216 = ssub.s32 256, 256
          %217 = vsyncadd %s208, %s216
          %s218 = smul.addr %s24, 2
          %s219 = smul.addr %s25, 2
          %s220 = sadd.s32 %s218, %s219
          %s221 = smul.addr %s220, 128
          %s222 = scalar_lea.hbm %s2, %s221
          %s224 = sshll.u32 %s211, 4
          %s225 = int_to_ptr.vmem [resolvable:$true] %s224
          %227 = dma.vmem_to_hbm [thread:$0]  %s225, 256, %s222, %s208
        $region40: #{tpu_custom_call.1} parent=27 // pred_fallthru
          _
      $region28: #{tpu_custom_call.1} parent=5 // pred_fallthru
        _
      %p228 = scmp.le.s32.totalorder 2, %s15
      // Predicated region
      $region41: #{tpu_custom_call.1} parent=5 // pred_check
        %p229 = pneg %p228
      $region42: #{tpu_custom_call.1} parent=5 // pred_check_branch
        %231 = sbr.rel (%p229) target = $region44
      $region43: #{tpu_custom_call.1} parent=5 // pred_region
        %s232 = ssub.s32 %s15, 2
        // Predicated region
        $region45: #{tpu_custom_call.1} parent=43 // pred_check
          %p233 = pneg %p112
        $region46: #{tpu_custom_call.1} parent=43 // pred_check_branch
          %235 = sbr.rel (%p233) target = $region48
        $region47: #{tpu_custom_call.1} parent=43 // pred_region
          %s236 = sand.u32 %s97, 1
          %s237 = scalar_lea.sflag [#allocation4], %s236
          %s238 = sand.u32 %s97, 1
          %s239 = smul.addr %s238, 16
          %s240 = scalar_lea.vmem [#allocation7], %s239
          %241 = dma.done %s237, 256
        $region48: #{tpu_custom_call.1} parent=43 // pred_fallthru
          _
      $region44: #{tpu_custom_call.1} parent=5 // pred_fallthru
        _
    $region6: #{tpu_custom_call.1} parent=1 // loop_footer
      %s19 = sadd.s32 1, %s15
    $region7: #{tpu_custom_call.1} parent=1 // loop_footer_branch
      %14 = sbr.rel target = $region3
    $region8: #{tpu_custom_call.1} parent=1 // loop_exit
      _
    %242 = vsyncpa [#allocation3], 1
    %s243 = scalar_lea.sflag [#allocation3], 1
    %244 = vsyncpa %s243, 1
    %245 = vsyncpa [#allocation6], 1
    %246 = vsyncpa [#allocation4], 1
    %s247 = scalar_lea.sflag [#allocation4], 1
    %248 = vsyncpa %s247, 1

</llo_original>
